<compile_context>
chip_gen: v7x
topology: tpu7x:2x2x1
jax: 0.10.0
libtpu: 0.0.40
codegen_flags: <defaults>
</compile_context>

<pallas_src>
import functools

import jax
import jax.numpy as jnp
from jax.experimental import pallas as pl
from jax.experimental.pallas import tpu as pltpu

_LANE = 128


def _round_up(x, m):
    return ((x + m - 1) // m) * m


def _cdiv(a, b):
    return (a + b - 1) // b


def _vmem_budget():
    """(compiler vmem limit, tiling budget) in bytes, per TensorCore."""
    try:
        cap = int(pltpu.get_tpu_info().vmem_capacity_bytes)
    except Exception:                       # conservative (v7x-sized) fallback
        cap = 64 * 1024 * 1024
    limit = max(32 * 1024 * 1024, (cap * 3) // 4)   # 96 MiB on 128-MiB parts, 48 MiB on v7x
    budget = limit - 8 * 1024 * 1024                # headroom for Mosaic internal scratch
    return limit, budget


def two_layer_kernel(x_ref, w1_ref, b1_ref, w2_ref, b2_ref, o_ref, acc_ref):
    hi = pl.program_id(1)                   # hidden-chunk (reduction) axis

    @pl.when(hi == 0)
    def _init():
        acc_ref[...] = jnp.zeros_like(acc_ref)

    cdt = w1_ref.dtype                      # MXU operand dtype (bf16 by default)
    h = jnp.dot(x_ref[...].astype(cdt), w1_ref[...],
                preferred_element_type=jnp.float32)
    h = jnp.maximum(h + b1_ref[...], 0.0)   # bias + ReLU in f32
    acc_ref[...] += jnp.dot(h.astype(cdt), w2_ref[...],
                            preferred_element_type=jnp.float32)

    @pl.when(hi == pl.num_programs(1) - 1)
    def _finalize():
        o_ref[...] = (acc_ref[...] + b2_ref[...]).astype(o_ref.dtype)


def _choose_tiles(N, D_in_p, H_p, D_out_p, x_bpe, w_bpe, out_bpe,
                  budget, max_tile_n, max_tile_h, n_align):
    # 1) Hidden chunk: largest lane multiple whose (double-buffered) weight
    #    slices use at most ~half the budget.
    def weight_bytes(th):
        return (2 * (D_in_p * th + th * D_out_p) * w_bpe   # w1/w2 chunks
                + 2 * th * 4 + 2 * D_out_p * 4)            # f32 bias chunks

    tile_h = max(_LANE, min(H_p, (max_tile_h // _LANE) * _LANE))
    while tile_h > _LANE and weight_bytes(tile_h) > budget // 2:
        tile_h -= _LANE
    # TODO(synk): if D_in/D_out grow so large that even a 128-wide H chunk
    # exceeds the budget, add D_in (K) chunking as well; unnecessary here.

    # 2) Batch tile from what's left.
    per_row = (2 * D_in_p * x_bpe           # double-buffered x tile
               + 2 * D_out_p * out_bpe      # double-buffered out tile
               + D_out_p * 4                # f32 accumulator scratch
               + tile_h * (4 + w_bpe))      # live f32 hidden + cast copy
    avail = max(budget - weight_bytes(tile_h), per_row * n_align)
    tile_n = int(min(max_tile_n, avail // per_row))
    tile_n = max(n_align, (tile_n // n_align) * n_align)
    tile_n = min(tile_n, _round_up(N, n_align))

    # 3) v7x megacore: keep >= 2 (preferably an even number of) batch steps.
    g = _cdiv(N, tile_n)
    if g == 1 and N >= 2 * n_align:
        tile_n = _round_up(_cdiv(N, 2), n_align)
        g = _cdiv(N, tile_n)
    if g > 1 and g % 2 == 1:
        t2 = _round_up(_cdiv(N, g + 1), n_align)
        if t2 >= n_align and _cdiv(N, t2) % 2 == 0:
            tile_n = t2
    return tile_n, tile_h


@functools.partial(jax.jit,
                   static_argnames=("use_bf16", "max_tile_n", "max_tile_h"))
def two_layer_net(x, w1, b1, w2, b2, *, use_bf16=True, max_tile_n=1024,
                  max_tile_h=4096):
    """y = relu(x @ w1 + b1) @ w2 + b2, fused in one Pallas TPU kernel."""
    N, D_in = x.shape
    H = w1.shape[1]
    D_out = w2.shape[1]

    out_dtype = x.dtype
    compute_dtype = jnp.bfloat16 if use_bf16 else x.dtype
    x_bpe = jnp.dtype(x.dtype).itemsize
    w_bpe = jnp.dtype(compute_dtype).itemsize
    out_bpe = jnp.dtype(out_dtype).itemsize

    D_in_p = _round_up(D_in, _LANE)
    H_p = _round_up(H, _LANE)
    D_out_p = _round_up(D_out, _LANE)

    vmem_limit, budget = _vmem_budget()
    n_align = 16 if w_bpe < 4 else 8        # bf16 wants 16-row batch tiles
    tile_n, tile_h = _choose_tiles(N, D_in_p, H_p, D_out_p, x_bpe, w_bpe,
                                   out_bpe, budget, max_tile_n, max_tile_h,
                                   n_align)
    H_p = _round_up(H_p, tile_h)            # whole number of hidden chunks
    grid_n = _cdiv(N, tile_n)               # ragged N: last block masked
    grid_h = H_p // tile_h

    # --- Operand prep. Zero padding is exactly semantics-preserving; the
    # copies are skipped whenever dims are already lane multiples, and x is
    # never cast in the wrapper (the kernel casts on the fly for the MXU).
    if D_in_p == D_in:
        xp = x
    else:
        xp = jnp.zeros((N, D_in_p), x.dtype).at[:, :D_in].set(x)

    if (D_in_p, H_p) == w1.shape:
        w1p = w1.astype(compute_dtype)
    else:
        w1p = jnp.zeros((D_in_p, H_p), compute_dtype).at[:D_in, :H].set(
            w1.astype(compute_dtype))
    if (H_p, D_out_p) == w2.shape:
        w2p = w2.astype(compute_dtype)
    else:
        w2p = jnp.zeros((H_p, D_out_p), compute_dtype).at[:H, :D_out].set(
            w2.astype(compute_dtype))

    b1p = jnp.zeros((1, H_p), jnp.float32).at[:, :H].set(
        b1.reshape(1, H).astype(jnp.float32))
    b2p = jnp.zeros((1, D_out_p), jnp.float32).at[:, :D_out].set(
        b2.reshape(1, D_out).astype(jnp.float32))

    weight_passes = grid_n if grid_h > 1 else 1
    cost = pl.CostEstimate(
        flops=2 * N * D_in_p * H_p + 2 * N * H_p * D_out_p,
        transcendentals=0,
        bytes_accessed=(xp.size * x_bpe
                        + weight_passes * (w1p.size + w2p.size) * w_bpe
                        + (b1p.size + b2p.size) * 4
                        + N * D_out_p * out_bpe),
    )

    y_p = pl.pallas_call(
        two_layer_kernel,
        out_shape=jax.ShapeDtypeStruct((N, D_out_p), out_dtype),
        grid_spec=pltpu.PrefetchScalarGridSpec(
            num_scalar_prefetch=0,
            grid=(grid_n, grid_h),
            in_specs=[
                # x / out stream per batch tile and stay put across H chunks;
                # weights/biases stream per H chunk (VMEM-resident if grid_h==1).
                pl.BlockSpec((tile_n, D_in_p), lambda i, h: (i, 0)),
                pl.BlockSpec((D_in_p, tile_h), lambda i, h: (0, h)),
                pl.BlockSpec((1, tile_h), lambda i, h: (0, h)),
                pl.BlockSpec((tile_h, D_out_p), lambda i, h: (h, 0)),
                pl.BlockSpec((1, D_out_p), lambda i, h: (0, 0)),
            ],
            out_specs=pl.BlockSpec((tile_n, D_out_p), lambda i, h: (i, 0)),
            scratch_shapes=[pltpu.VMEM((tile_n, D_out_p), jnp.float32)],
        ),
        compiler_params=pltpu.CompilerParams(
            dimension_semantics=("parallel", "arbitrary"),   # batch across TCs
            vmem_limit_bytes=int(vmem_limit),
        ),
        cost_estimate=cost,
    )(xp, w1p, b1p, w2p, b2p)

    return y_p if D_out_p == D_out else y_p[:, :D_out]


def _linear_init(key, fan_in, fan_out):
    # torch.nn.Linear default init: U(-1/sqrt(fan_in), 1/sqrt(fan_in)).
    kw, kb = jax.random.split(key)
    bound = 1.0 / jnp.sqrt(jnp.float32(fan_in))
    w = jax.random.uniform(kw, (fan_in, fan_out), jnp.float32, -bound, bound)
    b = jax.random.uniform(kb, (1, fan_out), jnp.float32, -bound, bound)
    return w, b


def _reference(x, w1, b1, w2, b2):
    h = jnp.maximum(x @ w1 + b1, 0.0)
    return h @ w2 + b2


if __name__ == "__main__":
    key = jax.random.PRNGKey(0)

    # --- Small shapes implied by the module (tight f32 check) ---
    N, D_in, H, D_out = 8, 32, 64, 16
    kx, k1, k2, k3 = jax.random.split(key, 4)
    x = jax.random.normal(kx, (N, D_in), jnp.float32)
    w1, b1 = _linear_init(k1, D_in, H)
    w2, b2 = _linear_init(k2, H, D_out)

    y = jax.block_until_ready(two_layer_net(x, w1, b1, w2, b2, use_bf16=False))
    y_ref = _reference(x, w1, b1, w2, b2)
    assert y.shape == (N, D_out)
    assert jnp.allclose(y, y_ref, atol=1e-5, rtol=1e-5)

    # --- Larger case: bf16 MXU path, batch tiled across >= 2 grid steps ---
    N2, D_in2, H2, D_out2 = 1024, 256, 512, 128
    kx2, k4, k5, k6 = jax.random.split(k3, 4)
    x2 = jax.random.normal(kx2, (N2, D_in2), jnp.float32)
    w1b, b1b = _linear_init(k4, D_in2, H2)
    w2b, b2b = _linear_init(k5, H2, D_out2)

    y2 = jax.block_until_ready(two_layer_net(x2, w1b, b1b, w2b, b2b))
    y2_ref = _reference(x2, w1b, b1b, w2b, b2b)
    assert y2.shape == (N2, D_out2)
    assert jnp.allclose(y2, y2_ref, atol=5e-2, rtol=5e-2)

    # --- H-chunked accumulator path (grid_h > 1), exact f32 math ---
    N3, D_in3, H3, D_out3 = 64, 128, 384, 64
    kx3, k7, k8 = jax.random.split(k6, 3)
    x3 = jax.random.normal(kx3, (N3, D_in3), jnp.float32)
    w1c, b1c = _linear_init(k7, D_in3, H3)
    w2c, b2c = _linear_init(k8, H3, D_out3)

    y3 = jax.block_until_ready(
        two_layer_net(x3, w1c, b1c, w2c, b2c, use_bf16=False, max_tile_h=128))
    y3_ref = _reference(x3, w1c, b1c, w2c, b2c)
    assert y3.shape == (N3, D_out3)
    assert jnp.allclose(y3, y3_ref, atol=2e-3, rtol=2e-3)

    print("KERNEL_OK")
</pallas_src>

<mosaic_0001>
module attributes {stable_mosaic.version = 11 : i64} {
  func.func @two_layer_kernel(%arg0: i32, %arg1: i32, %arg2: memref<8x128xf32, #tpu.memory_space<vmem>>, %arg3: memref<128x128xf32, #tpu.memory_space<vmem>>, %arg4: memref<1x128xf32, #tpu.memory_space<vmem>>, %arg5: memref<128x128xf32, #tpu.memory_space<vmem>>, %arg6: memref<1x128xf32, #tpu.memory_space<vmem>>, %arg7: memref<8x128xf32, #tpu.memory_space<vmem>>, %arg8: memref<8x128xf32, #tpu.memory_space<vmem>>) attributes {dimension_semantics = [#tpu.dimension_semantics<parallel>, #tpu.dimension_semantics<arbitrary>], iteration_bounds = array<i64: 1, 1>, scalar_prefetch = 0 : i64, scratch_operands = 1 : i64, tpu.core_type = #tpu.core_type<tc>, window_params = [{transform_indices = @transform_0, window_bounds = array<i64: 8, 128>}, {transform_indices = @transform_1, window_bounds = array<i64: 128, 128>}, {transform_indices = @transform_2, window_bounds = array<i64: 1, 128>}, {transform_indices = @transform_3, window_bounds = array<i64: 128, 128>}, {pipeline_mode = #tpu.pipeline_mode<synchronous>, transform_indices = @transform_4, window_bounds = array<i64: 1, 128>}, {transform_indices = @transform_5, window_bounds = array<i64: 8, 128>}]} {
    %c0_i32 = arith.constant 0 : i32
    %0 = arith.cmpi eq, %arg1, %c0_i32 : i32
    %1 = arith.extui %0 : i1 to i32
    %c0_i32_0 = arith.constant 0 : i32
    %2 = arith.cmpi ne, %1, %c0_i32_0 : i32
    scf.if %2 {
      %cst_16 = arith.constant 0.000000e+00 : f32
      %19 = vector.broadcast %cst_16 : f32 to vector<8x128xf32>
      %c0_17 = arith.constant 0 : index
      %c0_18 = arith.constant 0 : index
      %20 = vector.load %arg8[%c0_17, %c0_18] : memref<8x128xf32, #tpu.memory_space<vmem>>, vector<8x128xf32>
      tpu.vector_store %arg8[%c0_17, %c0_18], %19 {strides = array<i32>} : memref<8x128xf32, #tpu.memory_space<vmem>>, vector<8x128xf32>,
    } else {
    }
    %c0 = arith.constant 0 : index
    %c0_1 = arith.constant 0 : index
    %3 = vector.load %arg2[%c0, %c0_1] : memref<8x128xf32, #tpu.memory_space<vmem>>, vector<8x128xf32>
    %c0_2 = arith.constant 0 : index
    %c0_3 = arith.constant 0 : index
    %4 = vector.load %arg3[%c0_2, %c0_3] : memref<128x128xf32, #tpu.memory_space<vmem>>, vector<128x128xf32>
    %cst = arith.constant dense<0.000000e+00> : vector<8x128xf32>
    %5 = tpu.matmul %3, %4, %cst {dimension_numbers = #tpu.dot_dimension_numbers<[1], [0], [0], [1], [0, 0, 1, 1], [], []>} : vector<8x128xf32>, vector<128x128xf32>, vector<8x128xf32> -> vector<8x128xf32>
    %c0_4 = arith.constant 0 : index
    %c0_5 = arith.constant 0 : index
    %6 = vector.load %arg4[%c0_4, %c0_5] : memref<1x128xf32, #tpu.memory_space<vmem>>, vector<1x128xf32>
    %7 = vector.broadcast %6 : vector<1x128xf32> to vector<8x128xf32>
    %8 = arith.addf %5, %7 : vector<8x128xf32>
    %cst_6 = arith.constant 0.000000e+00 : f32
    %9 = vector.broadcast %cst_6 : f32 to vector<8x128xf32>
    %10 = arith.maximumf %8, %9 : vector<8x128xf32>
    %c0_7 = arith.constant 0 : index
    %c0_8 = arith.constant 0 : index
    %11 = vector.load %arg8[%c0_7, %c0_8] : memref<8x128xf32, #tpu.memory_space<vmem>>, vector<8x128xf32>
    %c0_9 = arith.constant 0 : index
    %c0_10 = arith.constant 0 : index
    %12 = vector.load %arg5[%c0_9, %c0_10] : memref<128x128xf32, #tpu.memory_space<vmem>>, vector<128x128xf32>
    %cst_11 = arith.constant dense<0.000000e+00> : vector<8x128xf32>
    %13 = tpu.matmul %10, %12, %cst_11 {dimension_numbers = #tpu.dot_dimension_numbers<[1], [0], [0], [1], [0, 0, 1, 1], [], []>} : vector<8x128xf32>, vector<128x128xf32>, vector<8x128xf32> -> vector<8x128xf32>
    %14 = arith.addf %11, %13 : vector<8x128xf32>
    %c0_12 = arith.constant 0 : index
    %c0_13 = arith.constant 0 : index
    %15 = vector.load %arg8[%c0_12, %c0_13] : memref<8x128xf32, #tpu.memory_space<vmem>>, vector<8x128xf32>
    tpu.vector_store %arg8[%c0_12, %c0_13], %14 {strides = array<i32>} : memref<8x128xf32, #tpu.memory_space<vmem>>, vector<8x128xf32>,
    %c0_i32_14 = arith.constant 0 : i32
    %16 = arith.cmpi eq, %arg1, %c0_i32_14 : i32
    %17 = arith.extui %16 : i1 to i32
    %c0_i32_15 = arith.constant 0 : i32
    %18 = arith.cmpi ne, %17, %c0_i32_15 : i32
    scf.if %18 {
      %c0_16 = arith.constant 0 : index
      %c0_17 = arith.constant 0 : index
      %19 = vector.load %arg8[%c0_16, %c0_17] : memref<8x128xf32, #tpu.memory_space<vmem>>, vector<8x128xf32>
      %c0_18 = arith.constant 0 : index
      %c0_19 = arith.constant 0 : index
      %20 = vector.load %arg6[%c0_18, %c0_19] : memref<1x128xf32, #tpu.memory_space<vmem>>, vector<1x128xf32>
      %21 = vector.broadcast %20 : vector<1x128xf32> to vector<8x128xf32>
      %22 = arith.addf %19, %21 : vector<8x128xf32>
      %c0_20 = arith.constant 0 : index
      %c0_21 = arith.constant 0 : index
      %23 = vector.load %arg7[%c0_20, %c0_21] : memref<8x128xf32, #tpu.memory_space<vmem>>, vector<8x128xf32>
      tpu.vector_store %arg7[%c0_20, %c0_21], %22 {strides = array<i32>} : memref<8x128xf32, #tpu.memory_space<vmem>>, vector<8x128xf32>,
    } else {
    }
    return
  }
  func.func @transform_0(%arg0: i32, %arg1: i32) -> (i32, i32) {
    %c0_i32 = arith.constant 0 : i32
    %c0_i32_0 = arith.constant 0 : i32
    return %arg0, %c0_i32 : i32, i32
  }
  func.func @transform_1(%arg0: i32, %arg1: i32) -> (i32, i32) {
    %c0_i32 = arith.constant 0 : i32
    %c0_i32_0 = arith.constant 0 : i32
    return %c0_i32, %arg1 : i32, i32
  }
  func.func @transform_2(%arg0: i32, %arg1: i32) -> (i32, i32) {
    %c0_i32 = arith.constant 0 : i32
    %c0_i32_0 = arith.constant 0 : i32
    return %c0_i32, %arg1 : i32, i32
  }
  func.func @transform_3(%arg0: i32, %arg1: i32) -> (i32, i32) {
    %c0_i32 = arith.constant 0 : i32
    %c0_i32_0 = arith.constant 0 : i32
    return %arg1, %c0_i32 : i32, i32
  }
  func.func @transform_4(%arg0: i32, %arg1: i32) -> (i32, i32) {
    %c0_i32 = arith.constant 0 : i32
    %c0_i32_0 = arith.constant 0 : i32
    %c0_i32_1 = arith.constant 0 : i32
    return %c0_i32, %c0_i32_0 : i32, i32
  }
  func.func @transform_5(%arg0: i32, %arg1: i32) -> (i32, i32) {
    %c0_i32 = arith.constant 0 : i32
    %c0_i32_0 = arith.constant 0 : i32
    return %arg0, %c0_i32 : i32, i32
  }
}

</mosaic_0001>

<llo_original>
// kernel: two_layer_net.1
$region0: #{two_layer_net.1}
  #allocation0 [shape = 'u32[]', space=smem, size = 0x4, offset = 0x4, fixed_abs, tag = 'smem constant byte address 0x4 - core index']
  #allocation1 [shape = 'u32[144,128]{1,0:T(1,128)}', space=vmem, size = 0x12000, scoped, tag = 'internal scratch']
  #allocation2 [shape = 'f32[8,128]{1,0:T(8,128)}', space=vmem, size = 0x1000, scoped, tag = 'scratch operand']
  %s0 = inlined_call_operand.vmem [shape: f32[8,128], index: 0, kind: input, shape index: {}]
  %s1 = inlined_call_operand.vmem [shape: f32[128,128], index: 1, kind: input, shape index: {}]
  %s2 = inlined_call_operand.vmem [shape: f32[1,128], index: 2, kind: input, shape index: {}]
  %s3 = inlined_call_operand.vmem [shape: f32[128,128], index: 3, kind: input, shape index: {}]
  %s4 = inlined_call_operand.vmem [shape: f32[1,128], index: 4, kind: input, shape index: {}]
  %s5 = inlined_call_operand.hbm [shape: f32[8,128], index: 5, kind: output, shape index: {}]
  %s6 = sld [smem:[#allocation0]]
  $region38: #{two_layer_net.1} parent=0
    _
  %s8 = ssub.s32 1, %s6
  %s9 = scalar_select 0, %s8, %s6
  $region1: #{two_layer_net.1} parent=0
    #allocation3 [shape = 'u8[4096]{0}', space=vmem, size = 0x1000, scoped, tag = 'output window, operand 0, single buffered']
    #allocation4 [shape = 's32[1]{0}', space=sflag, size = 0x4, scoped, tag = 'scoped memory for two_layer_net.1']
    %10 = vsyncpa [#allocation4], 0
    // Predicated region
    $region2: #{two_layer_net.1} parent=1 // pred_check
      _
    $region3: #{two_layer_net.1} parent=1 // pred_check_branch
      %12 = sbr.rel (0) target = $region5
    $region4: #{two_layer_net.1} parent=1 // pred_region
      _
    $region5: #{two_layer_net.1} parent=1 // pred_fallthru
      _
    // Predicated region
    $region6: #{two_layer_net.1} parent=1 // pred_check
      _
    $region7: #{two_layer_net.1} parent=1 // pred_check_branch
      %14 = sbr.rel (0) target = $region9
    $region8: #{two_layer_net.1} parent=1 // pred_region
      _
    $region9: #{two_layer_net.1} parent=1 // pred_fallthru
      _
    // Predicated region
    $region10: #{two_layer_net.1} parent=1 // pred_check
      _
    $region11: #{two_layer_net.1} parent=1 // pred_check_branch
      %16 = sbr.rel (0) target = $region13
    $region12: #{two_layer_net.1} parent=1 // pred_region
      _
    $region13: #{two_layer_net.1} parent=1 // pred_fallthru
      _
    // Predicated region
    $region14: #{two_layer_net.1} parent=1 // pred_check
      _
    $region15: #{two_layer_net.1} parent=1 // pred_check_branch
      %18 = sbr.rel (0) target = $region17
    $region16: #{two_layer_net.1} parent=1 // pred_region
      _
    $region17: #{two_layer_net.1} parent=1 // pred_fallthru
      _
    // Predicated region
    $region18: #{two_layer_net.1} parent=1 // pred_check
      _
    $region19: #{two_layer_net.1} parent=1 // pred_check_branch
      %20 = sbr.rel (0) target = $region21
    $region20: #{two_layer_net.1} parent=1 // pred_region
      _
    $region21: #{two_layer_net.1} parent=1 // pred_fallthru
      _
    %p21 = scmp.eq.s32.totalorder 0, 0
    // Predicated region
    $region22: #{two_layer_net.1} parent=1 // pred_check
      %p22 = pneg %p21
    $region23: #{two_layer_net.1} parent=1 // pred_check_branch
      %24 = sbr.rel (%p22) target = $region25
    $region24: #{two_layer_net.1} parent=1 // pred_region
      %25 = vst [vmem:[#allocation2] sm:$0xff] 0.0
    $region25: #{two_layer_net.1} parent=1 // pred_fallthru
      _
    %v26 = vld [vmem:[%s0] sm:$0xff]
    %v27 = vld [vmem:[%s1] sm:$0xff]
    %v28 = vld [vmem:[%s1 + $0x8] sm:$0xff]
    %v29 = vld [vmem:[%s1 + $0x10] sm:$0xff]
    %v30 = vld [vmem:[%s1 + $0x18] sm:$0xff]
    %v31 = vld [vmem:[%s1 + $0x20] sm:$0xff]
    %v32 = vld [vmem:[%s1 + $0x28] sm:$0xff]
    %v33 = vld [vmem:[%s1 + $0x30] sm:$0xff]
    %v34 = vld [vmem:[%s1 + $0x38] sm:$0xff]
    %v35 = vld [vmem:[%s1 + $0x40] sm:$0xff]
    %v36 = vld [vmem:[%s1 + $0x48] sm:$0xff]
    %v37 = vld [vmem:[%s1 + $0x50] sm:$0xff]
    %v38 = vld [vmem:[%s1 + $0x58] sm:$0xff]
    %v39 = vld [vmem:[%s1 + $0x60] sm:$0xff]
    %v40 = vld [vmem:[%s1 + $0x68] sm:$0xff]
    %v41 = vld [vmem:[%s1 + $0x70] sm:$0xff]
    %v42 = vld [vmem:[%s1 + $0x78] sm:$0xff]
    %v43 = vld [vmem:[%s2] sm:$0x1]
    %v45 = vlaneseq
    %v46 = vshrl.u32 %v45, 7
    %v47 = vsub.s32 0, %v46
    %v48 = vrot.slane %v43, %v47
    %50 = vmatprep.subr.mxu0 0.0
    %51 = vmatpush1.msra.mxu0 %v27
    %52 = vmatprep.subr.mxu0 0.0
    %53 = vmatpush1.msra.mxu0 %v28
    %54 = vmatprep.subr.mxu0 0.0
    %55 = vmatpush1.msra.mxu0 %v29
    %56 = vmatprep.subr.mxu0 0.0
    %57 = vmatpush1.msra.mxu0 %v30
    %58 = vmatprep.subr.mxu0 0.0
    %59 = vmatpush1.msra.mxu0 %v31
    %60 = vmatprep.subr.mxu0 0.0
    %61 = vmatpush1.msra.mxu0 %v32
    %62 = vmatprep.subr.mxu0 0.0
    %63 = vmatpush1.msra.mxu0 %v33
    %64 = vmatprep.subr.mxu0 0.0
    %65 = vmatpush1.msra.mxu0 %v34
    %66 = vmatprep.subr.mxu0 0.0
    %67 = vmatpush1.msra.mxu0 %v35
    %68 = vmatprep.subr.mxu0 0.0
    %69 = vmatpush1.msra.mxu0 %v36
    %70 = vmatprep.subr.mxu0 0.0
    %71 = vmatpush1.msra.mxu0 %v37
    %72 = vmatprep.subr.mxu0 0.0
    %73 = vmatpush1.msra.mxu0 %v38
    %74 = vmatprep.subr.mxu0 0.0
    %75 = vmatpush1.msra.mxu0 %v39
    %76 = vmatprep.subr.mxu0 0.0
    %77 = vmatpush1.msra.mxu0 %v40
    %78 = vmatprep.subr.mxu0 0.0
    %79 = vmatpush1.msra.mxu0 %v41
    %80 = vmatprep.subr.mxu0 0.0
    %81 = vmatpush1.msra.mxu0 %v42
    %82 = vmatprep.subr.mxu0 0.0
    %83 = vmatpush1.msra.mxu0 0.0
    %84 = vmatprep.subr.mxu0 0.0
    %85 = vmatpush1.msra.mxu0 0.0
    %86 = vmatprep.subr.mxu0 0.0
    %87 = vmatpush1.msra.mxu0 0.0
    %88 = vmatprep.subr.mxu0 0.0
    %89 = vmatpush1.msra.mxu0 0.0
    %90 = vmatprep.subr.mxu0 0.0
    %91 = vmatpush1.msra.mxu0 0.0
    %92 = vmatprep.subr.mxu0 0.0
    %93 = vmatpush1.msra.mxu0 0.0
    %94 = vmatprep.subr.mxu0 0.0
    %95 = vmatpush1.msra.mxu0 0.0
    %96 = vmatprep.subr.mxu0 0.0
    %97 = vmatpush1.msra.mxu0 0.0
    %98 = vmatprep.subr.mxu0 0.0
    %99 = vmatpush1.msra.mxu0 0.0
    %100 = vmatprep.subr.mxu0 0.0
    %101 = vmatpush1.msra.mxu0 0.0
    %102 = vmatprep.subr.mxu0 0.0
    %103 = vmatpush1.msra.mxu0 0.0
    %104 = vmatprep.subr.mxu0 0.0
    %105 = vmatpush1.msra.mxu0 0.0
    %106 = vmatprep.subr.mxu0 0.0
    %107 = vmatpush1.msra.mxu0 0.0
    %108 = vmatprep.subr.mxu0 0.0
    %109 = vmatpush1.msra.mxu0 0.0
    %110 = vmatprep.subr.mxu0 0.0
    %111 = vmatpush1.msra.mxu0 0.0
    %112 = vmatprep.subr.mxu0 0.0
    %113 = vmatpush1.msra.mxu0 0.0
    %114 = vmatprep.mubr.f32.mxu0 0.0
    %115 = vmatmul.mubr.f32.gmra.mrb[0].mxu0 %v26
    %v116 = vpop.f32.mrb[0].mxu0
    %v117 = vadd.f32 %v48, %v116
    %v118 = vpop.f32.mrb[0].mxu0
    %119 = vdwg.mxu0
    %v120 = vmax.f32 %v117, 0.0
    %v121 = vld [vmem:[#allocation2] sm:$0xff]
    %v122 = vld [vmem:[%s3] sm:$0xff]
    %v123 = vld [vmem:[%s3 + $0x8] sm:$0xff]
    %v124 = vld [vmem:[%s3 + $0x10] sm:$0xff]
    %v125 = vld [vmem:[%s3 + $0x18] sm:$0xff]
    %v126 = vld [vmem:[%s3 + $0x20] sm:$0xff]
    %v127 = vld [vmem:[%s3 + $0x28] sm:$0xff]
    %v128 = vld [vmem:[%s3 + $0x30] sm:$0xff]
    %v129 = vld [vmem:[%s3 + $0x38] sm:$0xff]
    %v130 = vld [vmem:[%s3 + $0x40] sm:$0xff]
    %v131 = vld [vmem:[%s3 + $0x48] sm:$0xff]
    %v132 = vld [vmem:[%s3 + $0x50] sm:$0xff]
    %v133 = vld [vmem:[%s3 + $0x58] sm:$0xff]
    %v134 = vld [vmem:[%s3 + $0x60] sm:$0xff]
    %v135 = vld [vmem:[%s3 + $0x68] sm:$0xff]
    %v136 = vld [vmem:[%s3 + $0x70] sm:$0xff]
    %v137 = vld [vmem:[%s3 + $0x78] sm:$0xff]
    %138 = vmatprep.subr.mxu0 0.0
    %139 = vmatpush1.msra.mxu0 %v122
    %140 = vmatprep.subr.mxu0 0.0
    %141 = vmatpush1.msra.mxu0 %v123
    %142 = vmatprep.subr.mxu0 0.0
    %143 = vmatpush1.msra.mxu0 %v124
    %144 = vmatprep.subr.mxu0 0.0
    %145 = vmatpush1.msra.mxu0 %v125
    %146 = vmatprep.subr.mxu0 0.0
    %147 = vmatpush1.msra.mxu0 %v126
    %148 = vmatprep.subr.mxu0 0.0
    %149 = vmatpush1.msra.mxu0 %v127
    %150 = vmatprep.subr.mxu0 0.0
    %151 = vmatpush1.msra.mxu0 %v128
    %152 = vmatprep.subr.mxu0 0.0
    %153 = vmatpush1.msra.mxu0 %v129
    %154 = vmatprep.subr.mxu0 0.0
    %155 = vmatpush1.msra.mxu0 %v130
    %156 = vmatprep.subr.mxu0 0.0
    %157 = vmatpush1.msra.mxu0 %v131
    %158 = vmatprep.subr.mxu0 0.0
    %159 = vmatpush1.msra.mxu0 %v132
    %160 = vmatprep.subr.mxu0 0.0
    %161 = vmatpush1.msra.mxu0 %v133
    %162 = vmatprep.subr.mxu0 0.0
    %163 = vmatpush1.msra.mxu0 %v134
    %164 = vmatprep.subr.mxu0 0.0
    %165 = vmatpush1.msra.mxu0 %v135
    %166 = vmatprep.subr.mxu0 0.0
    %167 = vmatpush1.msra.mxu0 %v136
    %168 = vmatprep.subr.mxu0 0.0
    %169 = vmatpush1.msra.mxu0 %v137
    %170 = vmatprep.subr.mxu0 0.0
    %171 = vmatpush1.msra.mxu0 0.0
    %172 = vmatprep.subr.mxu0 0.0
    %173 = vmatpush1.msra.mxu0 0.0
    %174 = vmatprep.subr.mxu0 0.0
    %175 = vmatpush1.msra.mxu0 0.0
    %176 = vmatprep.subr.mxu0 0.0
    %177 = vmatpush1.msra.mxu0 0.0
    %178 = vmatprep.subr.mxu0 0.0
    %179 = vmatpush1.msra.mxu0 0.0
    %180 = vmatprep.subr.mxu0 0.0
    %181 = vmatpush1.msra.mxu0 0.0
    %182 = vmatprep.subr.mxu0 0.0
    %183 = vmatpush1.msra.mxu0 0.0
    %184 = vmatprep.subr.mxu0 0.0
    %185 = vmatpush1.msra.mxu0 0.0
    %186 = vmatprep.subr.mxu0 0.0
    %187 = vmatpush1.msra.mxu0 0.0
    %188 = vmatprep.subr.mxu0 0.0
    %189 = vmatpush1.msra.mxu0 0.0
    %190 = vmatprep.subr.mxu0 0.0
    %191 = vmatpush1.msra.mxu0 0.0
    %192 = vmatprep.subr.mxu0 0.0
    %193 = vmatpush1.msra.mxu0 0.0
    %194 = vmatprep.subr.mxu0 0.0
    %195 = vmatpush1.msra.mxu0 0.0
    %196 = vmatprep.subr.mxu0 0.0
    %197 = vmatpush1.msra.mxu0 0.0
    %198 = vmatprep.subr.mxu0 0.0
    %199 = vmatpush1.msra.mxu0 0.0
    %200 = vmatprep.subr.mxu0 0.0
    %201 = vmatpush1.msra.mxu0 0.0
    %202 = vmatprep.mubr.f32.mxu0 0.0
    %203 = vmatmul.mubr.f32.gmra.mrb[0].mxu0 %v120
    %v204 = vpop.f32.mrb[0].mxu0
    %v205 = vadd.f32 0.0, %v204
    %v206 = vpop.f32.mrb[0].mxu0
    %207 = vdwg.mxu0
    %v208 = vadd.f32 %v121, %v205
    %209 = vst [vmem:[#allocation2] sm:$0xff] %v208
    // Predicated region
    $region26: #{two_layer_net.1} parent=1 // pred_check
      %p210 = pneg %p21
    $region27: #{two_layer_net.1} parent=1 // pred_check_branch
      %212 = sbr.rel (%p210) target = $region29
    $region28: #{two_layer_net.1} parent=1 // pred_region
      %v213 = vld [vmem:[#allocation2] sm:$0xff]
      %v214 = vld [vmem:[%s4] sm:$0x1]
      %v216 = vlaneseq
      %v217 = vshrl.u32 %v216, 7
      %v218 = vsub.s32 0, %v217
      %v219 = vrot.slane %v214, %v218
      %v221 = vadd.f32 %v213, %v219
      %222 = vst [vmem:[#allocation3] sm:$0xff] %v221
    $region29: #{two_layer_net.1} parent=1 // pred_fallthru
      _
    // Predicated region
    $region30: #{two_layer_net.1} parent=1 // pred_check
      _
    $region31: #{two_layer_net.1} parent=1 // pred_check_branch
      %224 = sbr.rel (0) target = $region33
    $region32: #{two_layer_net.1} parent=1 // pred_region
      %s226 = ssub.s32 128, 128
      %227 = vsyncadd [#allocation4], %s226
      %s229 = sshll.u32 [#allocation3], 4
      %s230 = int_to_ptr.vmem [resolvable:$true] %s229
      %232 = dma.vmem_to_hbm [thread:$0]  %s230, 128, %s5, [#allocation4]
    $region33: #{two_layer_net.1} parent=1 // pred_fallthru
      _
    // Predicated region
    $region34: #{two_layer_net.1} parent=1 // pred_check
      _
    $region35: #{two_layer_net.1} parent=1 // pred_check_branch
      %234 = sbr.rel (0) target = $region37
    $region36: #{two_layer_net.1} parent=1 // pred_region
      %235 = dma.done [#allocation4], 128
    $region37: #{two_layer_net.1} parent=1 // pred_fallthru
      _
    %236 = vsyncpa [#allocation4], 1

</llo_original>
